<compile_context>
chip_gen: v6e
topology: v6e:2x2x1
jax: 0.10.0
libtpu: 0.0.40
codegen_flags: <defaults>
</compile_context>

<pallas_src>
import functools

import jax
import jax.numpy as jnp
from jax.experimental import pallas as pl
from jax.experimental.pallas import tpu as pltpu

_MIB = 1024 * 1024


def _avg_pool_kernel(x_ref, o_ref, acc_ref, *, seq_len, block_seq, apply_mask):
    # x_ref  : (bb, bs, bh) input tile
    # o_ref  : (bb, bh) output tile (resident across the seq grid axis)
    # acc_ref: (bb, bh) f32 accumulator scratch
    k = pl.program_id(2)
    last = pl.num_programs(2) - 1

    @pl.when(k == 0)
    def _():
        acc_ref[...] = jnp.zeros_like(acc_ref)

    if apply_mask:
        # Unmasked fast path for every full seq block.
        @pl.when(k != last)
        def _():
            acc_ref[...] += jnp.sum(x_ref[...], axis=1, dtype=jnp.float32)

        # Mask only the single, partially-filled last seq block.
        @pl.when(k == last)
        def _():
            x = x_ref[...]
            # Scalar remainder on the scalar unit; raw iota compare per vreg.
            valid = seq_len - k * block_seq
            row = jax.lax.broadcasted_iota(jnp.int32, x.shape, 1)
            x = jnp.where(row < valid, x, jnp.zeros([], x.dtype))
            acc_ref[...] += jnp.sum(x, axis=1, dtype=jnp.float32)
    else:
        acc_ref[...] += jnp.sum(x_ref[...], axis=1, dtype=jnp.float32)

    @pl.when(k == last)
    def _():
        # Scale by the GLOBAL sequence length; single final store per tile.
        o_ref[...] = (acc_ref[...] * (1.0 / seq_len)).astype(o_ref.dtype)


def _packed_sublanes(dtype) -> int:
    itemsize = jnp.dtype(dtype).itemsize
    return {4: 8, 2: 16, 1: 32}.get(itemsize, 8)


def _vmem_capacity_bytes() -> int:
    default = 128 * _MIB
    try:
        info = pltpu.get_tpu_info()
        return int(getattr(info, "vmem_capacity_bytes", default))
    except Exception:  # interpret mode / older runtimes
        return default


def average_pooling(x, *, block_batch=None, block_seq=None, block_hidden=None):
    """Mean over dim=1 of a (B, S, H) array (== torch.mean(x, dim=1))."""
    b, s, h = x.shape
    itemsize = jnp.dtype(x.dtype).itemsize
    sub = _packed_sublanes(x.dtype)

    # Generation-aware VMEM budget: v7x has 64 MiB/TC, v5e/v6e have 128 MiB.
    vmem_cap = _vmem_capacity_bytes()
    vmem_limit = min(vmem_cap * 3 // 4, 64 * _MIB)      # 48 MiB on v7x, 64 MiB elsewhere
    target_block_bytes = min(vmem_cap // 6, 24 * _MIB)  # ~10 MiB v7x, ~21 MiB v5e/v6e

    if block_batch is None:
        # Match the packed sublane tile of the dtype (8 f32 / 16 bf16 / 32 i8)
        # so the (bb, bh) output tile stores unmasked.
        block_batch = b if b <= sub else sub

    if block_hidden is None:
        # If the batch grid has < 2 steps, split H (multiple of 128) so v7x's
        # second TensorCore has a parallel step to run. No-op for small H.
        if pl.cdiv(b, block_batch) < 2 and h % 256 == 0:
            block_hidden = h // 2
        else:
            block_hidden = h

    if block_seq is None:
        # Mem-bound kernel: big blocks amortize the ~0.35 us per-grid-step
        # overhead. Align to the packed sublane tile of the input dtype.
        cand = max(sub, target_block_bytes // max(1, block_batch * block_hidden * itemsize))
        cand = (cand // sub) * sub
        block_seq = s if cand >= s else cand

    grid = (pl.cdiv(b, block_batch), pl.cdiv(h, block_hidden), pl.cdiv(s, block_seq))
    apply_mask = (s % block_seq) != 0

    kernel = functools.partial(
        _avg_pool_kernel, seq_len=s, block_seq=block_seq, apply_mask=apply_mask
    )

    # Note: when B % block_batch != 0, padded batch rows only accumulate into
    # padded accumulator rows; rows are independent and Pallas drops the
    # out-of-bounds output rows, so the valid rows stay exact.
    return pl.pallas_call(
        kernel,
        out_shape=jax.ShapeDtypeStruct((b, h), x.dtype),
        grid_spec=pltpu.PrefetchScalarGridSpec(
            num_scalar_prefetch=0,
            grid=grid,
            in_specs=[
                pl.BlockSpec(
                    (block_batch, block_seq, block_hidden),
                    lambda i, j, k: (i, k, j),
                ),
            ],
            out_specs=pl.BlockSpec((block_batch, block_hidden), lambda i, j, k: (i, j)),
            scratch_shapes=[pltpu.VMEM((block_batch, block_hidden), jnp.float32)],
        ),
        compiler_params=pltpu.CompilerParams(
            dimension_semantics=("parallel", "parallel", "arbitrary"),
            vmem_limit_bytes=vmem_limit,
        ),
    )(x)


if __name__ == "__main__":
    key = jax.random.PRNGKey(0)

    # --- Test 1: small shapes implied by the module (batch=2, seq=8, hidden=32). ---
    B, S, H = 2, 8, 32
    x = jax.random.normal(key, (B, S, H), dtype=jnp.float32)
    out = jax.block_until_ready(average_pooling(x))
    ref = jnp.mean(x, axis=1)
    assert out.shape == (B, H)
    assert jnp.allclose(out, ref, atol=1e-6, rtol=1e-6)

    # --- Test 2: seq tiling + accumulator + partial-block masking + hidden split. ---
    key2 = jax.random.PRNGKey(0)
    B2, S2, H2 = 4, 300, 256
    x2 = jax.random.normal(key2, (B2, S2, H2), dtype=jnp.float32)
    out2 = jax.block_until_ready(average_pooling(x2, block_seq=48))  # 300 % 48 != 0
    ref2 = jnp.mean(x2, axis=1)
    assert out2.shape == (B2, H2)
    assert jnp.allclose(out2, ref2, atol=1e-5, rtol=1e-5)

    # --- Test 3: bf16 input (packed sublanes, cast-folded f32 accumulation). ---
    key3 = jax.random.PRNGKey(0)
    B3, S3, H3 = 16, 64, 128
    x3 = jax.random.normal(key3, (B3, S3, H3), dtype=jnp.bfloat16)
    out3 = jax.block_until_ready(average_pooling(x3))
    ref3 = jnp.mean(x3.astype(jnp.float32), axis=1).astype(jnp.bfloat16)
    assert out3.shape == (B3, H3)
    assert jnp.allclose(out3.astype(jnp.float32), ref3.astype(jnp.float32),
                        atol=1e-2, rtol=1e-2)

    print("KERNEL_OK")
</pallas_src>

<mosaic_0001>
module attributes {stable_mosaic.version = 11 : i64} {
  func.func @_avg_pool_kernel(%arg0: i32, %arg1: i32, %arg2: i32, %arg3: memref<2x8x32xf32, #tpu.memory_space<vmem>>, %arg4: memref<2x32xf32, #tpu.memory_space<vmem>>, %arg5: memref<2x32xf32, #tpu.memory_space<vmem>>) attributes {dimension_semantics = [#tpu.dimension_semantics<parallel>, #tpu.dimension_semantics<parallel>, #tpu.dimension_semantics<arbitrary>], iteration_bounds = array<i64: 1, 1, 1>, scalar_prefetch = 0 : i64, scratch_operands = 1 : i64, tpu.core_type = #tpu.core_type<tc>, window_params = [{transform_indices = @transform_0, window_bounds = array<i64: 2, 8, 32>}, {transform_indices = @transform_1, window_bounds = array<i64: 2, 32>}]} {
    %c0_i32 = arith.constant 0 : i32
    %0 = arith.cmpi eq, %arg2, %c0_i32 : i32
    %1 = arith.extui %0 : i1 to i32
    %c0_i32_0 = arith.constant 0 : i32
    %2 = arith.cmpi ne, %1, %c0_i32_0 : i32
    scf.if %2 {
      %cst_9 = arith.constant 0.000000e+00 : f32
      %11 = vector.broadcast %cst_9 : f32 to vector<2x32xf32>
      %c0_10 = arith.constant 0 : index
      %c0_11 = arith.constant 0 : index
      %12 = vector.load %arg5[%c0_10, %c0_11] : memref<2x32xf32, #tpu.memory_space<vmem>>, vector<2x32xf32>
      tpu.vector_store %arg5[%c0_10, %c0_11], %11 {strides = array<i32>} : memref<2x32xf32, #tpu.memory_space<vmem>>, vector<2x32xf32>,
    } else {
    }
    %c0 = arith.constant 0 : index
    %c0_1 = arith.constant 0 : index
    %3 = vector.load %arg5[%c0, %c0_1] : memref<2x32xf32, #tpu.memory_space<vmem>>, vector<2x32xf32>
    %c0_2 = arith.constant 0 : index
    %c0_3 = arith.constant 0 : index
    %c0_4 = arith.constant 0 : index
    %4 = vector.load %arg3[%c0_2, %c0_3, %c0_4] : memref<2x8x32xf32, #tpu.memory_space<vmem>>, vector<2x8x32xf32>
    %cst = arith.constant dense<0.000000e+00> : vector<2x32xf32>
    %5 = vector.multi_reduction <add>, %4, %cst [1] : vector<2x8x32xf32> to vector<2x32xf32>
    %6 = arith.addf %3, %5 : vector<2x32xf32>
    %c0_5 = arith.constant 0 : index
    %c0_6 = arith.constant 0 : index
    %7 = vector.load %arg5[%c0_5, %c0_6] : memref<2x32xf32, #tpu.memory_space<vmem>>, vector<2x32xf32>
    tpu.vector_store %arg5[%c0_5, %c0_6], %6 {strides = array<i32>} : memref<2x32xf32, #tpu.memory_space<vmem>>, vector<2x32xf32>,
    %c0_i32_7 = arith.constant 0 : i32
    %8 = arith.cmpi eq, %arg2, %c0_i32_7 : i32
    %9 = arith.extui %8 : i1 to i32
    %c0_i32_8 = arith.constant 0 : i32
    %10 = arith.cmpi ne, %9, %c0_i32_8 : i32
    scf.if %10 {
      %c0_9 = arith.constant 0 : index
      %c0_10 = arith.constant 0 : index
      %11 = vector.load %arg5[%c0_9, %c0_10] : memref<2x32xf32, #tpu.memory_space<vmem>>, vector<2x32xf32>
      %cst_11 = arith.constant 1.250000e-01 : f32
      %12 = vector.broadcast %cst_11 : f32 to vector<2x32xf32>
      %13 = arith.mulf %11, %12 : vector<2x32xf32>
      %c0_12 = arith.constant 0 : index
      %c0_13 = arith.constant 0 : index
      %14 = vector.load %arg4[%c0_12, %c0_13] : memref<2x32xf32, #tpu.memory_space<vmem>>, vector<2x32xf32>
      tpu.vector_store %arg4[%c0_12, %c0_13], %13 {strides = array<i32>} : memref<2x32xf32, #tpu.memory_space<vmem>>, vector<2x32xf32>,
    } else {
    }
    return
  }
  func.func @transform_0(%arg0: i32, %arg1: i32, %arg2: i32) -> (i32, i32, i32) {
    %c0_i32 = arith.constant 0 : i32
    return %arg0, %arg2, %arg1 : i32, i32, i32
  }
  func.func @transform_1(%arg0: i32, %arg1: i32, %arg2: i32) -> (i32, i32) {
    %c0_i32 = arith.constant 0 : i32
    return %arg0, %arg1 : i32, i32
  }
}

</mosaic_0001>

<llo_original>
// kernel: tpu_custom_call.1
$region0: #{tpu_custom_call.1}
  #allocation0 [shape = 'u32[]', space=smem, size = 0x4, offset = 0x4, fixed_abs, tag = 'smem constant byte address 0x4 - core index']
  #allocation1 [shape = 'u32[144,128]{1,0:T(1,128)}', space=vmem, size = 0x12000, scoped, tag = 'internal scratch']
  #allocation2 [shape = 'f32[2,32]{1,0:T(2,128)}', space=vmem, size = 0x400, scoped, tag = 'scratch operand']
  %s0 = inlined_call_operand.hbm [shape: f32[2,8,32], index: 0, kind: input, shape index: {}]
  %s1 = inlined_call_operand.hbm [shape: f32[2,32], index: 1, kind: output, shape index: {}]
  %s2 = sld [smem:[#allocation0]]
  $region26: #{tpu_custom_call.1} parent=0
    _
  %s4 = ssub.s32 1, %s2
  %s5 = scalar_select 0, %s4, %s2
  $region1: #{tpu_custom_call.1} parent=0
    #allocation3 [shape = 'u8[8192]{0}', space=vmem, size = 0x2000, scoped, tag = 'input window, operand 0, single buffered']
    #allocation4 [shape = 's32[1]{0}', space=sflag, size = 0x4, scoped, tag = 'scoped memory for tpu_custom_call.1']
    #allocation5 [shape = 's32[1]{0}', space=sflag, size = 0x4, scoped, tag = 'scoped memory for tpu_custom_call.1']
    #allocation6 [shape = 'u8[1024]{0}', space=vmem, size = 0x400, scoped, tag = 'output window, operand 0, single buffered']
    %6 = vsyncpa [#allocation4], 0
    %7 = vsyncpa [#allocation5], 0
    // Predicated region
    $region2: #{tpu_custom_call.1} parent=1 // pred_check
      _
    $region3: #{tpu_custom_call.1} parent=1 // pred_check_branch
      %9 = sbr.rel (0) target = $region5
    $region4: #{tpu_custom_call.1} parent=1 // pred_region
      %s11 = ssub.s32 256, 256
      %12 = vsyncadd [#allocation4], %s11
      %s13 = sshll.u32 [#allocation3], 4
      %s14 = int_to_ptr.vmem [resolvable:$true] %s13
      %19 = dma.hbm_to_vmem [thread:$0]  %s0, 256, %s14, [#allocation4], 128, 128, 8
    $region5: #{tpu_custom_call.1} parent=1 // pred_fallthru
      _
    // Predicated region
    $region6: #{tpu_custom_call.1} parent=1 // pred_check
      _
    $region7: #{tpu_custom_call.1} parent=1 // pred_check_branch
      %21 = sbr.rel (0) target = $region9
    $region8: #{tpu_custom_call.1} parent=1 // pred_region
      %22 = dma.done [#allocation4], 256
    $region9: #{tpu_custom_call.1} parent=1 // pred_fallthru
      _
    %p23 = scmp.eq.s32.totalorder 0, 0
    // Predicated region
    $region10: #{tpu_custom_call.1} parent=1 // pred_check
      %p24 = pneg %p23
    $region11: #{tpu_custom_call.1} parent=1 // pred_check_branch
      %26 = sbr.rel (%p24) target = $region13
    $region12: #{tpu_custom_call.1} parent=1 // pred_region
      %vm27 = vcmask 254976
      %28 = vst.msk [vmem:[#allocation2] sm:$0x3] %vm27, 0.0
    $region13: #{tpu_custom_call.1} parent=1 // pred_fallthru
      _
    %v29 = vld [vmem:[#allocation2] sm:$0x3]
    %v30 = vld [vmem:[#allocation3] sm:$0xff]
    %v31 = vld [vmem:[#allocation3 + $0x8] sm:$0xff]
    %vm32 = vcmask 261120
    %v33 = vsel %vm32, %v30, 0.0
    %v34 = vrot.slane %v33, 4
    %v35 = vadd.f32 %v33, %v34
    %v36 = vrot.slane %v35, 2
    %v37 = vadd.f32 %v35, %v36
    %v38 = vrot.slane %v37, 1
    %v39 = vadd.f32 %v37, %v38
    %v40 = vsel %vm32, %v31, 0.0
    %v41 = vrot.slane %v40, 4
    %v42 = vadd.f32 %v40, %v41
    %v43 = vrot.slane %v42, 2
    %v44 = vadd.f32 %v42, %v43
    %v45 = vrot.slane %v44, 1
    %v46 = vadd.f32 %v44, %v45
    %vm49 = vcmask 1041409
    %v50 = vsel %vm49, %v46, %v39
    %v52 = vadd.f32 %v29, %v50
    %vm53 = vcmask 254976
    %54 = vst.msk [vmem:[#allocation2] sm:$0x3] %vm53, %v52
    // Predicated region
    $region14: #{tpu_custom_call.1} parent=1 // pred_check
      %p55 = pneg %p23
    $region15: #{tpu_custom_call.1} parent=1 // pred_check_branch
      %57 = sbr.rel (%p55) target = $region17
    $region16: #{tpu_custom_call.1} parent=1 // pred_region
      %v58 = vld [vmem:[#allocation2] sm:$0x3]
      %v59 = vmul.f32 %v58, 0.125
      %60 = vst.msk [vmem:[#allocation6] sm:$0x3] %vm53, %v59
    $region17: #{tpu_custom_call.1} parent=1 // pred_fallthru
      _
    // Predicated region
    $region18: #{tpu_custom_call.1} parent=1 // pred_check
      _
    $region19: #{tpu_custom_call.1} parent=1 // pred_check_branch
      %62 = sbr.rel (0) target = $region21
    $region20: #{tpu_custom_call.1} parent=1 // pred_region
      %s64 = ssub.s32 32, 32
      %65 = vsyncadd [#allocation5], %s64
      %s67 = sshll.u32 [#allocation6], 4
      %s68 = int_to_ptr.vmem [resolvable:$true] %s67
      %70 = dma.vmem_to_hbm [thread:$0]  %s68, 32, %s1, [#allocation5]
    $region21: #{tpu_custom_call.1} parent=1 // pred_fallthru
      _
    // Predicated region
    $region22: #{tpu_custom_call.1} parent=1 // pred_check
      _
    $region23: #{tpu_custom_call.1} parent=1 // pred_check_branch
      %72 = sbr.rel (0) target = $region25
    $region24: #{tpu_custom_call.1} parent=1 // pred_region
      %73 = dma.done [#allocation5], 32
    $region25: #{tpu_custom_call.1} parent=1 // pred_fallthru
      _
    %74 = vsyncpa [#allocation4], 1
    %75 = vsyncpa [#allocation5], 1

</llo_original>
